<compile_context>
chip_gen: v7x
topology: tpu7x:2x2x1
jax: 0.10.0
libtpu: 0.0.40
codegen_flags: <defaults>
</compile_context>

<pallas_src>
import jax
import jax.numpy as jnp
from jax.experimental import pallas as pl
from jax.experimental.pallas import tpu as pltpu


_TARGET_BLOCK_BYTES = 6 * 1024 * 1024   # per input block; VMEM holds ~4x (in+out, double-buffered)
_VMEM_LIMIT_BYTES = 40 * 1024 * 1024    # < v7x 64 MiB/TC physical; well under v5e/v6e 128 MiB


def _cdiv(a, b):
    return -(-a // b)


def _choose_tiles(B, C_blk, P, itemsize, target_bytes=_TARGET_BLOCK_BYTES):
    """Pick (TB, TP, grid) for input blocks of shape (TB, C_blk, TP) over a (B, *, P) array.

    TP is either a multiple of 128 (cdiv grid over P; Pallas masks the ragged last block) or
    the full P (full-dim exception, used when one block spans all of H*W).  TB divides B.
    Blocks are sized near `target_bytes`; the total step count is nudged to be even (>= 2)
    so both v7x TensorCores get equal work (harmless on single-TC v5e/v6e).
    """
    n_cols = _cdiv(P, 128)
    col_bytes = C_blk * 128 * itemsize

    # Lane columns per block for one batch element, capped by the byte budget.
    tp_cols = max(1, min(n_cols, target_bytes // max(col_bytes, 1)))

    # If one block already spans all of P, pack whole batch elements into it too.
    TB = 1
    if tp_cols >= n_cols:
        row_bytes = C_blk * P * itemsize
        for d in range(1, B + 1):
            if B % d == 0 and d * row_bytes <= target_bytes:
                TB = d

    def total_steps(tb, cols):
        return (B // tb) * _cdiv(n_cols, cols)

    if total_steps(TB, tp_cols) % 2 == 1:
        fixed = False
        if total_steps(TB, tp_cols) == 1 and B >= 2:
            TB = max(d for d in range(1, B) if B % d == 0)   # largest proper divisor -> >=2 steps
            fixed = total_steps(TB, tp_cols) % 2 == 0
        if not fixed and n_cols >= 2:
            hi = min(tp_cols, n_cols)
            for cand in range(hi, max(0, hi // 2), -1):      # shrink the lane tile at most 2x
                if total_steps(TB, cand) % 2 == 0:
                    tp_cols = cand
                    break

    if tp_cols >= n_cols:
        TP, grid_p = P, 1            # full lane extent in one block (full-dim exception)
    else:
        TP = tp_cols * 128           # lane-dense multiple of 128; ragged last block is masked
        grid_p = _cdiv(P, TP)
    return TB, TP, (B // TB, grid_p)


def _shift_full_c(x2, fold):
    """Full-channel path: every channel is read and written (works for any fold alignment)."""
    B, C, P = x2.shape
    f2, f3 = 2 * fold, 3 * fold
    itemsize = jnp.dtype(x2.dtype).itemsize
    TB, TP, grid = _choose_tiles(B, C, P, itemsize)

    def kernel(x_ref, o_ref):
        # Fused shift-add over the first 2*fold channels; pass-through for the rest.
        o_ref[:, :f2, :] = x_ref[:, :f2, :] + x_ref[:, fold:f3, :]
        if f2 < C:
            o_ref[:, f2:, :] = x_ref[:, f2:, :]

    return pl.pallas_call(
        kernel,
        out_shape=jax.ShapeDtypeStruct((B, C, P), x2.dtype),
        grid_spec=pltpu.PrefetchScalarGridSpec(
            num_scalar_prefetch=0,
            grid=grid,
            in_specs=[pl.BlockSpec((TB, C, TP), lambda b, p: (b, 0, p))],
            out_specs=pl.BlockSpec((TB, C, TP), lambda b, p: (b, 0, p)),
        ),
        compiler_params=pltpu.CompilerParams(
            dimension_semantics=("parallel", "parallel"),
            vmem_limit_bytes=_VMEM_LIMIT_BYTES,
        ),
    )(x2)


def _shift_aliased(x2, fold):
    """Aliased fast path (fold sublane-aligned): only channels [0, 3*fold) are read and
    [0, 2*fold) written; channels [2*fold, C) stay untouched in the aliased HBM buffer,
    cutting HBM traffic from 2*C to 5*fold channel-rows per spatial column (~3.2x less)."""
    B, C, P = x2.shape
    f2, f3 = 2 * fold, 3 * fold
    itemsize = jnp.dtype(x2.dtype).itemsize
    TB, TP, grid = _choose_tiles(B, f3, P, itemsize)

    def kernel(x_ref, o_ref):
        # x_ref: (TB, 3*fold, TP); o_ref: (TB, 2*fold, TP).  Single dense, sublane-aligned store.
        o_ref[...] = x_ref[:, :f2, :] + x_ref[:, fold:f3, :]

    return pl.pallas_call(
        kernel,
        out_shape=jax.ShapeDtypeStruct((B, C, P), x2.dtype),
        grid_spec=pltpu.PrefetchScalarGridSpec(
            num_scalar_prefetch=0,
            grid=grid,
            in_specs=[pl.BlockSpec((TB, f3, TP), lambda b, p: (b, 0, p))],
            out_specs=pl.BlockSpec((TB, f2, TP), lambda b, p: (b, 0, p)),
        ),
        input_output_aliases={0: 0},
        compiler_params=pltpu.CompilerParams(
            dimension_semantics=("parallel", "parallel"),
            vmem_limit_bytes=_VMEM_LIMIT_BYTES,
        ),
    )(x2)


def channel_shift(x: jnp.ndarray, fold_div: int = 8) -> jnp.ndarray:
    """ChannelShift.enhance for x of shape (B, C, H, W); `self.net` treated as identity."""
    B, C, H, W = x.shape
    P = H * W
    fold = C // fold_div
    assert 3 * fold <= C, "fold_div too small for channel count (matches PyTorch constraint)"

    if fold == 0:
        # out[:, 0:] = x  ->  pure pass-through; no data movement needed.
        return x

    x2 = x.reshape(B, C, P)
    itemsize = jnp.dtype(x2.dtype).itemsize
    sublane_pack = {4: 8, 2: 16, 1: 32}.get(itemsize)
    if sublane_pack is not None and fold % sublane_pack == 0:
        out = _shift_aliased(x2, fold)
    else:
        out = _shift_full_c(x2, fold)
    return out.reshape(B, C, H, W)


def _reference(x: jnp.ndarray, fold_div: int = 8) -> jnp.ndarray:
    """Pure-JAX reference of ChannelShift.enhance (non-GCN path)."""
    B, C, H, W = x.shape
    fold = C // fold_div
    if fold == 0:
        return x
    top = x[:, :2 * fold] + x[:, fold:3 * fold]
    return jnp.concatenate([top, x[:, 2 * fold:]], axis=1)


if __name__ == "__main__":
    k0, k1, k2 = jax.random.split(jax.random.PRNGKey(0), 3)

    # 1) Main shape: C=16, fold_div=8 -> fold=2 (unaligned fold -> full-channel path).
    x1 = jax.random.normal(k0, (2, 16, 16, 16), dtype=jnp.float32)
    y1 = jax.block_until_ready(channel_shift(x1, fold_div=8))
    assert jnp.allclose(y1, _reference(x1, 8), atol=1e-6, rtol=1e-6), "mismatch (main shape)"

    # 2) Non-128-divisible spatial extent (H*W = 100): handled without any pad/slice copies.
    x2 = jax.random.normal(k1, (1, 8, 10, 10), dtype=jnp.float32)
    y2 = jax.block_until_ready(channel_shift(x2, fold_div=8))
    assert jnp.allclose(y2, _reference(x2, 8), atol=1e-6, rtol=1e-6), "mismatch (ragged lanes)"

    # 3) Sublane-aligned fold (C=64 -> fold=8): exercises the aliased reduced-traffic path.
    x3 = jax.random.normal(k2, (2, 64, 8, 16), dtype=jnp.float32)
    y3 = jax.block_until_ready(channel_shift(x3, fold_div=8))
    assert jnp.allclose(y3, _reference(x3, 8), atol=1e-6, rtol=1e-6), "mismatch (aliased path)"

    print("KERNEL_OK")
</pallas_src>

<mosaic_0001>
module attributes {stable_mosaic.version = 11 : i64} {
  func.func @kernel(%arg0: i32, %arg1: i32, %arg2: memref<1x16x256xf32, #tpu.memory_space<vmem>>, %arg3: memref<1x16x256xf32, #tpu.memory_space<vmem>>) attributes {dimension_semantics = [#tpu.dimension_semantics<parallel>, #tpu.dimension_semantics<parallel>], iteration_bounds = array<i64: 2, 1>, scalar_prefetch = 0 : i64, scratch_operands = 0 : i64, tpu.core_type = #tpu.core_type<tc>, window_params = [{transform_indices = @transform_0, window_bounds = array<i64: 1, 16, 256>}, {transform_indices = @transform_1, window_bounds = array<i64: 1, 16, 256>}]} {
    %c0 = arith.constant 0 : index
    %c0_0 = arith.constant 0 : index
    %c0_1 = arith.constant 0 : index
    %0 = vector.load %arg2[%c0, %c0_0, %c0_1] : memref<1x16x256xf32, #tpu.memory_space<vmem>>, vector<1x4x256xf32>
    %c0_2 = arith.constant 0 : index
    %c2 = arith.constant 2 : index
    %c0_3 = arith.constant 0 : index
    %1 = vector.load %arg2[%c0_2, %c2, %c0_3] : memref<1x16x256xf32, #tpu.memory_space<vmem>>, vector<1x4x256xf32>
    %2 = arith.addf %0, %1 : vector<1x4x256xf32>
    %c0_4 = arith.constant 0 : index
    %c0_5 = arith.constant 0 : index
    %c0_6 = arith.constant 0 : index
    %3 = vector.load %arg3[%c0_4, %c0_5, %c0_6] : memref<1x16x256xf32, #tpu.memory_space<vmem>>, vector<1x4x256xf32>
    tpu.vector_store %arg3[%c0_4, %c0_5, %c0_6], %2 {strides = array<i32>} : memref<1x16x256xf32, #tpu.memory_space<vmem>>, vector<1x4x256xf32>,
    %c0_7 = arith.constant 0 : index
    %c4 = arith.constant 4 : index
    %c0_8 = arith.constant 0 : index
    %4 = vector.load %arg2[%c0_7, %c4, %c0_8] : memref<1x16x256xf32, #tpu.memory_space<vmem>>, vector<1x12x256xf32>
    %c0_9 = arith.constant 0 : index
    %c4_10 = arith.constant 4 : index
    %c0_11 = arith.constant 0 : index
    %5 = vector.load %arg3[%c0_9, %c4_10, %c0_11] : memref<1x16x256xf32, #tpu.memory_space<vmem>>, vector<1x12x256xf32>
    tpu.vector_store %arg3[%c0_9, %c4_10, %c0_11], %4 {strides = array<i32>} : memref<1x16x256xf32, #tpu.memory_space<vmem>>, vector<1x12x256xf32>,
    return
  }
  func.func @transform_0(%arg0: i32, %arg1: i32) -> (i32, i32, i32) {
    %c0_i32 = arith.constant 0 : i32
    %c0_i32_0 = arith.constant 0 : i32
    return %arg0, %c0_i32, %arg1 : i32, i32, i32
  }
  func.func @transform_1(%arg0: i32, %arg1: i32) -> (i32, i32, i32) {
    %c0_i32 = arith.constant 0 : i32
    %c0_i32_0 = arith.constant 0 : i32
    return %arg0, %c0_i32, %arg1 : i32, i32, i32
  }
}

</mosaic_0001>

<llo_original>
// kernel: tpu_custom_call.1
$region0: #{tpu_custom_call.1}
  #allocation0 [shape = 'u32[]', space=smem, size = 0x4, offset = 0x4, fixed_abs, tag = 'smem constant byte address 0x4 - core index']
  #allocation1 [shape = 'u32[144,128]{1,0:T(1,128)}', space=vmem, size = 0x12000, scoped, tag = 'internal scratch']
  %s0 = inlined_call_operand.hbm [shape: f32[2,16,256], index: 0, kind: input, shape index: {}]
  %s1 = inlined_call_operand.hbm [shape: f32[2,16,256], index: 1, kind: output, shape index: {}]
  %s2 = sld [smem:[#allocation0]]
  $region41: #{tpu_custom_call.1} parent=0
    _
  %s4 = ssub.s32 1, %s2
  %s5 = scalar_select 0, %s4, %s2
  $region1: #{tpu_custom_call.1} parent=0
    #allocation2 [shape = 'u8[32768]{0}', space=vmem, size = 0x8000, scoped, tag = 'input window, operand 0']
    #allocation3 [shape = 's32[2]{0}', space=sflag, size = 0x8, scoped, tag = 'scoped memory for tpu_custom_call.1']
    #allocation4 [shape = 's32[2]{0}', space=sflag, size = 0x8, scoped, tag = 'scoped memory for tpu_custom_call.1']
    #allocation5 [shape = 'u8[32768]{0}', space=vmem, size = 0x8000, scoped, tag = 'output window, operand 0']
    %6 = vsyncpa [#allocation3], 0
    %s7 = scalar_lea.sflag [#allocation3], 1
    %8 = vsyncpa %s7, 0
    %9 = vsyncpa [#allocation4], 0
    %s10 = scalar_lea.sflag [#allocation4], 1
    %11 = vsyncpa %s10, 0
    loop: start=0, step=1, limit=4
    $region2: #{tpu_custom_call.1} parent=1 // loop_pre_header
      _
    $region3: #{tpu_custom_call.1} parent=1 // loop_header
      %s13 = sphi 0, %s17
      %p14 = scmp.ge.s32.totalorder %s13, 4
      %s20 = sphi 0, %s32
      %s21 = sphi 0, %s28
      %s22 = sphi 0, %s20
      %s23 = sphi 0, %s21
      %s24 = sphi 0, %s22
      %s25 = sphi 0, %s23
      %s37 = sphi 0, %s39
      %s40 = sphi 0, %s37
      %s41 = sphi 0, %s40
      %s57 = sphi 0, %s41
      %s65 = sphi 0, %s67
      %s68 = sphi 0, %s65
      %s69 = sphi 0, %s68
      %s85 = sphi 0, %s69
    $region4: #{tpu_custom_call.1} parent=1 // loop_header_branch
      %16 = sbr.rel (%p14) target = $region8
    $region5: #{tpu_custom_call.1} parent=1 // loop_body
      %s18 = ssub.s32 %s13, 1
      %s19 = ssub.s32 %s13, 2
      %s26 = sadd.s32 1, %s21
      %p27 = scmp.ge.s32.totalorder %s26, 1
      %s28 = scalar_select %p27, 0, %s26
      %s29 = sadd.s32 1, %s20
      %s30 = scalar_select %p27, %s29, %s20
      %p31 = scmp.ge.s32.totalorder %s30, 2
      %s32 = scalar_select %p31, 0, %s30
      %s33 = ssub.s32 %s20, %s32
      %s34 = ssub.s32 %s21, %s28
      %s35 = sor.u32 %s33, %s34
      %p36 = scmp.eq.s32.totalorder %s35, 0
      %s38 = sadd.s32 %s37, 1
      %s39 = scalar_select %p36, %s37, %s38
      %p42 = pneg %p36
      %p43 = scmp.eq.s32.totalorder %s13, 1
      %p44 = por %p42, %p43
      %p45 = scmp.ne.s32.totalorder %s37, %s40
      %p46 = scmp.eq.s32.totalorder %s13, 0
      %p47 = por %p45, %p46
      %p48 = scmp.ne.s32.totalorder %s37, %s40
      %p49 = scmp.eq.s32.totalorder %s18, 1
      %p50 = por %p48, %p49
      %p51 = scmp.ne.s32.totalorder %s40, %s41
      %p52 = scmp.eq.s32.totalorder %s18, 0
      %p53 = por %p51, %p52
      %p54 = scmp.ne.s32.totalorder %s40, %s41
      %p55 = scmp.eq.s32.totalorder %s19, 1
      %p56 = por %p54, %p55
      %p58 = scmp.ne.s32.totalorder %s41, %s57
      %p59 = scmp.eq.s32.totalorder %s19, 0
      %p60 = por %p58, %p59
      %s61 = ssub.s32 %s20, %s32
      %s62 = ssub.s32 %s21, %s28
      %s63 = sor.u32 %s61, %s62
      %p64 = scmp.eq.s32.totalorder %s63, 0
      %s66 = sadd.s32 %s65, 1
      %s67 = scalar_select %p64, %s65, %s66
      %p70 = pneg %p64
      %p71 = scmp.eq.s32.totalorder %s13, 1
      %p72 = por %p70, %p71
      %p73 = scmp.ne.s32.totalorder %s65, %s68
      %p74 = scmp.eq.s32.totalorder %s13, 0
      %p75 = por %p73, %p74
      %p76 = scmp.ne.s32.totalorder %s65, %s68
      %p77 = scmp.eq.s32.totalorder %s18, 1
      %p78 = por %p76, %p77
      %p79 = scmp.ne.s32.totalorder %s68, %s69
      %p80 = scmp.eq.s32.totalorder %s18, 0
      %p81 = por %p79, %p80
      %p82 = scmp.ne.s32.totalorder %s68, %s69
      %p83 = scmp.eq.s32.totalorder %s19, 1
      %p84 = por %p82, %p83
      %p86 = scmp.ne.s32.totalorder %s69, %s85
      %p87 = scmp.eq.s32.totalorder %s19, 0
      %p88 = por %p86, %p87
      %p89 = scmp.le.s32.totalorder 1, %s13
      %p90 = scmp.lt.s32.totalorder %s13, 3
      %p91 = pnand %p89, %p90
      %p92 = pneg %p91
      // Predicated region
      $region9: #{tpu_custom_call.1} parent=5 // pred_check
        _
      $region10: #{tpu_custom_call.1} parent=5 // pred_check_branch
        %94 = sbr.rel (%p91) target = $region12
      $region11: #{tpu_custom_call.1} parent=5 // pred_region
        %s95 = ssub.s32 %s13, 1
      $region12: #{tpu_custom_call.1} parent=5 // pred_fallthru
        _
      %p96 = scmp.lt.s32.totalorder %s13, 2
      // Predicated region
      $region13: #{tpu_custom_call.1} parent=5 // pred_check
        %p97 = pneg %p96
      $region14: #{tpu_custom_call.1} parent=5 // pred_check_branch
        %99 = sbr.rel (%p97) target = $region16
      $region15: #{tpu_custom_call.1} parent=5 // pred_region
        // Predicated region
        $region17: #{tpu_custom_call.1} parent=15 // pred_check
          %p100 = pneg %p47
        $region18: #{tpu_custom_call.1} parent=15 // pred_check_branch
          %102 = sbr.rel (%p100) target = $region20
        $region19: #{tpu_custom_call.1} parent=15 // pred_region
          %s103 = sand.u32 %s37, 1
          %s104 = scalar_lea.sflag [#allocation3], %s103
          %s105 = sand.u32 %s37, 1
          %s106 = smul.addr %s105, 32
          %s107 = scalar_lea.vmem [#allocation2], %s106
          %s108 = smul.u32 2, %s21
          %s110 = ssub.s32 512, 512
          %111 = vsyncadd %s104, %s110
          %s112 = smul.addr %s20, 4
          %s113 = sadd.s32 %s108, %s112
          %s114 = smul.addr %s113, 128
          %s115 = scalar_lea.hbm %s0, %s114
          %s116 = sshll.u32 %s107, 4
          %s117 = int_to_ptr.vmem [resolvable:$true] %s116
          %122 = dma.hbm_to_vmem [thread:$0]  %s115, 512, %s117, %s104, 256, 256, 16
        $region20: #{tpu_custom_call.1} parent=15 // pred_fallthru
          _
      $region16: #{tpu_custom_call.1} parent=5 // pred_fallthru
        _
      %p123 = scmp.le.s32.totalorder 1, %s13
      %p124 = scmp.lt.s32.totalorder %s13, 3
      %p125 = pnand %p123, %p124
      %p126 = pneg %p125
      // Predicated region
      $region21: #{tpu_custom_call.1} parent=5 // pred_check
        _
      $region22: #{tpu_custom_call.1} parent=5 // pred_check_branch
        %128 = sbr.rel (%p125) target = $region24
      $region23: #{tpu_custom_call.1} parent=5 // pred_region
        %s129 = ssub.s32 %s13, 1
        %s130 = sand.u32 %s40, 1
        %s131 = scalar_lea.sflag [#allocation3], %s130
        %s132 = sand.u32 %s40, 1
        %s133 = smul.addr %s132, 32
        %s134 = scalar_lea.vmem [#allocation2], %s133
        // Predicated region
        $region25: #{tpu_custom_call.1} parent=23 // pred_check
          %p135 = pneg %p53
        $region26: #{tpu_custom_call.1} parent=23 // pred_check_branch
          %137 = sbr.rel (%p135) target = $region28
        $region27: #{tpu_custom_call.1} parent=23 // pred_region
          %138 = dma.done %s131, 512
        $region28: #{tpu_custom_call.1} parent=23 // pred_fallthru
          _
        %s139 = sand.u32 %s40, 1
        %s140 = scalar_lea.sflag [#allocation3], %s139
        %s141 = sand.u32 %s40, 1
        %s142 = smul.addr %s141, 32
        %s143 = scalar_lea.vmem [#allocation2], %s142
        %p144 = pneg %p53
        %p145 = pneg %p50
        %p146 = pneg %p81
        %p147 = pneg %p78
        %s148 = sand.u32 %s68, 1
        %s149 = scalar_lea.sflag [#allocation4], %s148
        %s150 = sand.u32 %s68, 1
        %s151 = smul.addr %s150, 32
        %s152 = scalar_lea.vmem [#allocation5], %s151
        %s153 = smul.u32 2, %s23
        %s154 = smul.u32 2, %s23
        %v155 = vld [vmem:[%s134] sm:$0xf]
        %v156 = vld [vmem:[%s134 + $0x8] sm:$0xf]
        %v157 = vld [vmem:[%s134] sm:$0x3c]
        %v158 = vld [vmem:[%s134 + $0x8] sm:$0x3c]
        %v161 = vrot.slane %v157, 2
        %v162 = vrot.slane %v158, 2
        %v165 = vadd.f32 %v155, %v161
        %v166 = vadd.f32 %v156, %v162
        %167 = vst [vmem:[%s152] sm:$0xf] %v165
        %168 = vst [vmem:[%s152 + $0x8] sm:$0xf] %v166
        %v169 = vld [vmem:[%s134] sm:$0xf0]
        %v170 = vld [vmem:[%s134 + $0x8] sm:$0xf0]
        %v171 = vld [vmem:[%s134 + $0x10] sm:$0xff]
        %v172 = vld [vmem:[%s134 + $0x18] sm:$0xff]
        %173 = vst [vmem:[%s152] sm:$0xf0] %v169
        %174 = vst [vmem:[%s152 + $0x8] sm:$0xf0] %v170
        %175 = vst [vmem:[%s152 + $0x10] sm:$0xff] %v171
        %176 = vst [vmem:[%s152 + $0x18] sm:$0xff] %v172
        %s177 = sand.u32 %s68, 1
        %s178 = scalar_lea.sflag [#allocation4], %s177
        %s179 = sand.u32 %s68, 1
        %s180 = smul.addr %s179, 32
        %s181 = scalar_lea.vmem [#allocation5], %s180
        // Predicated region
        $region29: #{tpu_custom_call.1} parent=23 // pred_check
          %p182 = pneg %p78
        $region30: #{tpu_custom_call.1} parent=23 // pred_check_branch
          %184 = sbr.rel (%p182) target = $region32
        $region31: #{tpu_custom_call.1} parent=23 // pred_region
          %s185 = smul.u32 2, %s23
          %s187 = ssub.s32 512, 512
          %188 = vsyncadd %s178, %s187
          %s189 = smul.addr %s22, 4
          %s190 = sadd.s32 %s185, %s189
          %s191 = smul.addr %s190, 128
          %s192 = scalar_lea.hbm %s1, %s191
          %s193 = sshll.u32 %s181, 4
          %s194 = int_to_ptr.vmem [resolvable:$true] %s193
          %199 = dma.vmem_to_hbm [thread:$0]  %s194, 512, %s192, %s178, 256, 256, 16
        $region32: #{tpu_custom_call.1} parent=23 // pred_fallthru
          _
      $region24: #{tpu_custom_call.1} parent=5 // pred_fallthru
        _
      %p200 = scmp.le.s32.totalorder 2, %s13
      // Predicated region
      $region33: #{tpu_custom_call.1} parent=5 // pred_check
        %p201 = pneg %p200
      $region34: #{tpu_custom_call.1} parent=5 // pred_check_branch
        %203 = sbr.rel (%p201) target = $region36
      $region35: #{tpu_custom_call.1} parent=5 // pred_region
        %s204 = ssub.s32 %s13, 2
        // Predicated region
        $region37: #{tpu_custom_call.1} parent=35 // pred_check
          %p205 = pneg %p84
        $region38: #{tpu_custom_call.1} parent=35 // pred_check_branch
          %207 = sbr.rel (%p205) target = $region40
        $region39: #{tpu_custom_call.1} parent=35 // pred_region
          %s208 = sand.u32 %s69, 1
          %s209 = scalar_lea.sflag [#allocation4], %s208
          %s210 = sand.u32 %s69, 1
          %s211 = smul.addr %s210, 32
          %s212 = scalar_lea.vmem [#allocation5], %s211
          %213 = dma.done %s209, 512
        $region40: #{tpu_custom_call.1} parent=35 // pred_fallthru
          _
      $region36: #{tpu_custom_call.1} parent=5 // pred_fallthru
        _
    $region6: #{tpu_custom_call.1} parent=1 // loop_footer
      %s17 = sadd.s32 1, %s13
    $region7: #{tpu_custom_call.1} parent=1 // loop_footer_branch
      %12 = sbr.rel target = $region3
    $region8: #{tpu_custom_call.1} parent=1 // loop_exit
      _
    %214 = vsyncpa [#allocation3], 1
    %s215 = scalar_lea.sflag [#allocation3], 1
    %216 = vsyncpa %s215, 1
    %217 = vsyncpa [#allocation4], 1
    %s218 = scalar_lea.sflag [#allocation4], 1
    %219 = vsyncpa %s218, 1

</llo_original>
